<compile_context>
chip_gen: v6e
topology: v6e:2x2x1
jax: 0.10.0
libtpu: 0.0.40
codegen_flags: <defaults>
</compile_context>

<pallas_src>
import jax
import jax.numpy as jnp
from jax import lax
from jax.experimental import pallas as pl
from jax.experimental.pallas import tpu as pltpu

EPS = 1e-5
CPAD = 128   # lane-padded channel / hidden width


def _make_kernel(N, L):
    NL = N * L
    L2 = L // 2
    NL2 = N * L2
    L4 = L // 4

    def kernel(x_ref,                                   # (N*L, CPAD)
               w1_ref, b1_ref, g1_ref, bt1_ref,         # conv1 (384,128) / bn1 (1,128)
               w2_ref, b2_ref, g2_ref, bt2_ref,         # conv2 (384,128) / bn2 (1,128)
               fw1_ref, fb1_ref,                        # fc1 (128,128)/(1,128)
               fw2_ref, fb2_ref,                        # fc2 (128,128)/(1,128)
               o_ref,                                   # (N, CPAD)
               y1_ref, y2_ref):                         # VMEM scratch (NL,128),(NL2,128)

        def conv_bn_relu_pool(xf, rows, seg_len, w, b, g, bt, y_scr):
            # xf: (rows, CPAD) = per-sample segments of seg_len rows, stacked.
            # Conv1d(k=3, pad=1) as one im2col matmul, then batch-stat BN,
            # ReLU, MaxPool1d(2) via stride-2 sublane loads from scratch.
            row_id = lax.broadcasted_iota(jnp.int32, (rows, CPAD), 0)
            pos = row_id % seg_len
            x_prev = jnp.where(pos == 0, 0.0,
                               pltpu.roll(xf, shift=1, axis=0))
            x_next = jnp.where(pos == seg_len - 1, 0.0,
                               pltpu.roll(xf, shift=rows - 1, axis=0))
            im2col = jnp.concatenate([x_prev, xf, x_next], axis=1)   # (rows, 3*CPAD)
            h = jnp.dot(im2col, w, preferred_element_type=jnp.float32) + b

            # BatchNorm1d training-mode stats: per-channel over batch*length.
            mean = jnp.mean(h, axis=0, keepdims=True)                # (1, CPAD)
            d = h - mean
            var = jnp.mean(d * d, axis=0, keepdims=True)             # biased
            scale = lax.rsqrt(var + EPS) * g
            shift = bt - mean * scale
            y = jnp.maximum(h * scale + shift, 0.0)                  # ReLU

            # MaxPool1d(2): pairs never cross sample boundaries (L even).
            y_scr[...] = y
            half = rows // 2
            return jnp.maximum(y_scr[pl.ds(0, half, stride=2), :],
                               y_scr[pl.ds(1, half, stride=2), :])

        p1 = conv_bn_relu_pool(x_ref[...], NL, L,
                               w1_ref[...], b1_ref[...], g1_ref[...], bt1_ref[...],
                               y1_ref)                               # (NL2, CPAD)
        p2 = conv_bn_relu_pool(p1, NL2, L2,
                               w2_ref[...], b2_ref[...], g2_ref[...], bt2_ref[...],
                               y2_ref)                               # (N*L4, CPAD)

        # Sum over remaining length per sample, whole batch at once.
        feat = jnp.sum(p2.reshape(N, L4, CPAD), axis=1)              # (N, CPAD)

        # FC head: whole-batch matmuls, single lane-dense store.
        z = jnp.dot(feat, fw1_ref[...], preferred_element_type=jnp.float32) + fb1_ref[...]
        z = jnp.maximum(z, 0.0)
        z = jnp.dot(z, fw2_ref[...], preferred_element_type=jnp.float32) + fb2_ref[...]
        o_ref[...] = jax.nn.sigmoid(z)                               # only col 0 is real

    return kernel


def relation_network_forward(x_ncl, params):
    """x_ncl: (N, Cin=128, L) float32, PyTorch layout. params: 12 padded arrays."""
    N, Cin, L = x_ncl.shape
    assert Cin == CPAD, "kernel expects input_size == 128 (module default)"
    assert L % 4 == 0
    x_flat = jnp.transpose(x_ncl, (0, 2, 1)).reshape(N * L, Cin)     # NLC, flattened

    vmem = pl.BlockSpec(memory_space=pltpu.MemorySpace.VMEM)
    out = pl.pallas_call(
        _make_kernel(N, L),
        out_shape=jax.ShapeDtypeStruct((N, CPAD), jnp.float32),
        in_specs=[vmem] * (1 + len(params)),
        out_specs=vmem,
        scratch_shapes=[pltpu.VMEM((N * L, CPAD), jnp.float32),
                        pltpu.VMEM((N * L // 2, CPAD), jnp.float32)],
    )(x_flat, *params)
    return out[:, :1]                                                # (N, 1)


def reference_forward(x_nlc, params):
    """Pure-JAX reference on UNPADDED params (NLC layout)."""
    (w1, b1, g1, bt1, w2, b2, g2, bt2, fw1, fb1, fw2, fb2) = params

    def conv(x, w, b):  # x (N,L,Ci), w (3,Ci,Co)
        L = x.shape[1]
        xp = jnp.pad(x, ((0, 0), (1, 1), (0, 0)))
        out = sum(jnp.einsum('nlc,cd->nld', xp[:, k:k + L, :], w[k]) for k in range(3))
        return out + b

    def bn_relu_pool(h, g, bt):
        mean = jnp.mean(h, axis=(0, 1), keepdims=True)
        var = jnp.mean((h - mean) ** 2, axis=(0, 1), keepdims=True)
        y = (h - mean) / jnp.sqrt(var + EPS) * g + bt
        y = jnp.maximum(y, 0.0)
        Nn, Lh, C = y.shape
        return jnp.max(y.reshape(Nn, Lh // 2, 2, C), axis=2)

    h = bn_relu_pool(conv(x_nlc, w1, b1), g1, bt1)
    h = bn_relu_pool(conv(h, w2, b2), g2, bt2)
    f = jnp.sum(h, axis=1)
    z = jnp.maximum(f @ fw1 + fb1, 0.0)
    return jax.nn.sigmoid(z @ fw2 + fb2)


def _pad2(a, r, c):
    return jnp.zeros((r, c), a.dtype).at[:a.shape[0], :a.shape[1]].set(a)


def _pad_row(v, c):
    return jnp.zeros((1, c), v.dtype).at[0, :v.shape[0]].set(v)


def _pad_conv_im2col(w_kco, ci_pad, co_pad):
    # (3, Ci, Co) -> zero-pad -> (3*ci_pad, co_pad) im2col weight.
    K, ci, co = w_kco.shape
    wp = jnp.zeros((K, ci_pad, co_pad), w_kco.dtype).at[:, :ci, :co].set(w_kco)
    return wp.reshape(K * ci_pad, co_pad)


if __name__ == "__main__":
    # Module defaults: input_size=128, hidden_size=64. Small batch/length.
    N, L, CIN, H = 2, 16, 128, 64

    key = jax.random.PRNGKey(0)
    ks = jax.random.split(key, 12)

    # Synthetic parameters in PyTorch shapes.
    w1_t = jax.random.normal(ks[0], (H, CIN, 3), jnp.float32) * 0.05   # (Co,Ci,K)
    b1   = jax.random.normal(ks[1], (H,), jnp.float32) * 0.05
    g1   = 1.0 + 0.1 * jax.random.normal(ks[2], (H,), jnp.float32)
    bt1  = 0.1 * jax.random.normal(ks[3], (H,), jnp.float32)
    w2_t = jax.random.normal(ks[4], (H, H, 3), jnp.float32) * 0.05
    b2   = jax.random.normal(ks[5], (H,), jnp.float32) * 0.05
    g2   = 1.0 + 0.1 * jax.random.normal(ks[6], (H,), jnp.float32)
    bt2  = 0.1 * jax.random.normal(ks[7], (H,), jnp.float32)
    fw1_t = jax.random.normal(ks[8], (H, H), jnp.float32) * 0.05        # (out,in)
    fb1   = jax.random.normal(ks[9], (H,), jnp.float32) * 0.05
    fw2_t = jax.random.normal(ks[10], (1, H), jnp.float32) * 0.05       # (out,in)
    fb2   = jax.random.normal(ks[11], (1,), jnp.float32) * 0.05

    # Kernel layouts: conv weights as lane-padded im2col (3*128, 128);
    # fc weights (in,out) zero-padded to (128,128); per-channel vecs (1,128).
    w1_kco = jnp.transpose(w1_t, (2, 1, 0))     # (3, CIN, H)
    w2_kco = jnp.transpose(w2_t, (2, 1, 0))     # (3, H, H)
    kernel_params = (
        _pad_conv_im2col(w1_kco, CPAD, CPAD),
        _pad_row(b1, CPAD), _pad_row(g1, CPAD), _pad_row(bt1, CPAD),
        _pad_conv_im2col(w2_kco, CPAD, CPAD),
        _pad_row(b2, CPAD), _pad_row(g2, CPAD), _pad_row(bt2, CPAD),
        _pad2(fw1_t.T, CPAD, CPAD), _pad_row(fb1, CPAD),
        _pad2(fw2_t.T, CPAD, CPAD), _pad_row(fb2, CPAD),
    )

    # Reference (unpadded) parameters.
    ref_params = (w1_kco, b1, g1, bt1, w2_kco, b2, g2, bt2,
                  fw1_t.T, fb1, fw2_t.T, fb2)

    # Input in PyTorch NCL layout.
    x_ncl = jax.random.normal(jax.random.PRNGKey(42), (N, CIN, L), jnp.float32)

    out = relation_network_forward(x_ncl, kernel_params)
    out = jax.block_until_ready(out)

    ref = reference_forward(jnp.transpose(x_ncl, (0, 2, 1)), ref_params)
    assert out.shape == (N, 1)
    assert jnp.all(jnp.isfinite(out))
    assert jnp.allclose(out, ref, atol=1e-3, rtol=1e-3), (out, ref)

    print("KERNEL_OK")
</pallas_src>

<mosaic_0001>
module attributes {stable_mosaic.version = 11 : i64} {
  func.func @kernel(%arg0: memref<32x128xf32, #tpu.memory_space<vmem>>, %arg1: memref<384x128xf32, #tpu.memory_space<vmem>>, %arg2: memref<1x128xf32, #tpu.memory_space<vmem>>, %arg3: memref<1x128xf32, #tpu.memory_space<vmem>>, %arg4: memref<1x128xf32, #tpu.memory_space<vmem>>, %arg5: memref<384x128xf32, #tpu.memory_space<vmem>>, %arg6: memref<1x128xf32, #tpu.memory_space<vmem>>, %arg7: memref<1x128xf32, #tpu.memory_space<vmem>>, %arg8: memref<1x128xf32, #tpu.memory_space<vmem>>, %arg9: memref<128x128xf32, #tpu.memory_space<vmem>>, %arg10: memref<1x128xf32, #tpu.memory_space<vmem>>, %arg11: memref<128x128xf32, #tpu.memory_space<vmem>>, %arg12: memref<1x128xf32, #tpu.memory_space<vmem>>, %arg13: memref<2x128xf32, #tpu.memory_space<vmem>>, %arg14: memref<32x128xf32, #tpu.memory_space<vmem>>, %arg15: memref<16x128xf32, #tpu.memory_space<vmem>>) attributes {dimension_semantics = [], scalar_prefetch = 0 : i64, scratch_operands = 2 : i64, tpu.core_type = #tpu.core_type<tc>} {
    %c0 = arith.constant 0 : index
    %c0_0 = arith.constant 0 : index
    %0 = vector.load %arg0[%c0, %c0_0] : memref<32x128xf32, #tpu.memory_space<vmem>>, vector<32x128xf32>
    %c0_1 = arith.constant 0 : index
    %c0_2 = arith.constant 0 : index
    %1 = vector.load %arg1[%c0_1, %c0_2] : memref<384x128xf32, #tpu.memory_space<vmem>>, vector<384x128xf32>
    %c0_3 = arith.constant 0 : index
    %c0_4 = arith.constant 0 : index
    %2 = vector.load %arg2[%c0_3, %c0_4] : memref<1x128xf32, #tpu.memory_space<vmem>>, vector<1x128xf32>
    %c0_5 = arith.constant 0 : index
    %c0_6 = arith.constant 0 : index
    %3 = vector.load %arg3[%c0_5, %c0_6] : memref<1x128xf32, #tpu.memory_space<vmem>>, vector<1x128xf32>
    %c0_7 = arith.constant 0 : index
    %c0_8 = arith.constant 0 : index
    %4 = vector.load %arg4[%c0_7, %c0_8] : memref<1x128xf32, #tpu.memory_space<vmem>>, vector<1x128xf32>
    %5 = tpu.iota {dimensions = array<i32: 0>} : vector<32x128xi32>
    %c16_i32 = arith.constant 16 : i32
    %c0_i32 = arith.constant 0 : i32
    %6 = arith.cmpi eq, %c16_i32, %c0_i32 : i32
    %c1_i32 = arith.constant 1 : i32
    %7 = arith.select %6, %c1_i32, %c16_i32 : i32
    %8 = vector.broadcast %7 : i32 to vector<32x128xi32>
    %9 = arith.remsi %5, %8 : vector<32x128xi32>
    %c0_i32_9 = arith.constant 0 : i32
    %10 = vector.broadcast %c0_i32_9 : i32 to vector<32x128xi32>
    %11 = arith.cmpi ne, %9, %10 : vector<32x128xi32>
    %c0_i32_10 = arith.constant 0 : i32
    %12 = vector.broadcast %c0_i32_10 : i32 to vector<32x128xi32>
    %13 = arith.cmpi slt, %9, %12 : vector<32x128xi32>
    %c0_i32_11 = arith.constant 0 : i32
    %14 = arith.cmpi slt, %7, %c0_i32_11 : i32
    %15 = vector.broadcast %14 : i1 to vector<32x128xi1>
    %16 = vector.broadcast %15 : vector<32x128xi1> to vector<32x128xi1>
    %17 = arith.xori %13, %16 : vector<32x128xi1>
    %18 = arith.andi %17, %11 : vector<32x128xi1>
    %19 = vector.broadcast %7 : i32 to vector<32x128xi32>
    %20 = arith.addi %9, %19 : vector<32x128xi32>
    %21 = arith.select %18, %20, %9 : vector<32x128xi1>, vector<32x128xi32>
    %c0_i32_12 = arith.constant 0 : i32
    %22 = vector.broadcast %c0_i32_12 : i32 to vector<32x128xi32>
    %23 = arith.cmpi eq, %21, %22 : vector<32x128xi32>
    %c1_i32_13 = arith.constant 1 : i32
    %24 = tpu.dynamic_rotate %0 by %c1_i32_13 dim 0 : vector<32x128xf32>, i32 -> vector<32x128xf32>
    %cst = arith.constant 0.000000e+00 : f32
    %25 = vector.broadcast %cst : f32 to vector<32x128xf32>
    %26 = arith.select %23, %25, %24 : vector<32x128xi1>, vector<32x128xf32>
    %c15_i32 = arith.constant 15 : i32
    %27 = vector.broadcast %c15_i32 : i32 to vector<32x128xi32>
    %28 = arith.cmpi eq, %21, %27 : vector<32x128xi32>
    %c31_i32 = arith.constant 31 : i32
    %29 = tpu.dynamic_rotate %0 by %c31_i32 dim 0 : vector<32x128xf32>, i32 -> vector<32x128xf32>
    %cst_14 = arith.constant 0.000000e+00 : f32
    %30 = vector.broadcast %cst_14 : f32 to vector<32x128xf32>
    %31 = arith.select %28, %30, %29 : vector<32x128xi1>, vector<32x128xf32>
    %32 = tpu.concatenate %26, %0, %31 in 1 : vector<32x128xf32>, vector<32x128xf32>, vector<32x128xf32> -> vector<32x384xf32>
    %cst_15 = arith.constant dense<0.000000e+00> : vector<32x128xf32>
    %33 = tpu.matmul %32, %1, %cst_15 {dimension_numbers = #tpu.dot_dimension_numbers<[1], [0], [0], [1], [0, 0, 1, 1], [], []>} : vector<32x384xf32>, vector<384x128xf32>, vector<32x128xf32> -> vector<32x128xf32>
    %34 = vector.broadcast %2 : vector<1x128xf32> to vector<32x128xf32>
    %35 = arith.addf %33, %34 : vector<32x128xf32>
    %cst_16 = arith.constant dense<0.000000e+00> : vector<128xf32>
    %36 = vector.multi_reduction <add>, %35, %cst_16 [0] : vector<32x128xf32> to vector<128xf32>
    %37 = vector.shape_cast %36 : vector<128xf32> to vector<1x128xf32>
    %cst_17 = arith.constant 3.200000e+01 : f32
    %38 = vector.broadcast %cst_17 : f32 to vector<1x128xf32>
    %39 = arith.divf %37, %38 : vector<1x128xf32>
    %40 = vector.broadcast %39 : vector<1x128xf32> to vector<32x128xf32>
    %41 = arith.subf %35, %40 : vector<32x128xf32>
    %42 = arith.mulf %41, %41 : vector<32x128xf32>
    %cst_18 = arith.constant dense<0.000000e+00> : vector<128xf32>
    %43 = vector.multi_reduction <add>, %42, %cst_18 [0] : vector<32x128xf32> to vector<128xf32>
    %44 = vector.shape_cast %43 : vector<128xf32> to vector<1x128xf32>
    %cst_19 = arith.constant 3.200000e+01 : f32
    %45 = vector.broadcast %cst_19 : f32 to vector<1x128xf32>
    %46 = arith.divf %44, %45 : vector<1x128xf32>
    %cst_20 = arith.constant 9.99999974E-6 : f32
    %47 = vector.broadcast %cst_20 : f32 to vector<1x128xf32>
    %48 = arith.addf %46, %47 : vector<1x128xf32>
    %49 = math.rsqrt %48 : vector<1x128xf32>
    %50 = arith.mulf %49, %3 : vector<1x128xf32>
    %51 = arith.mulf %39, %50 : vector<1x128xf32>
    %52 = arith.subf %4, %51 : vector<1x128xf32>
    %53 = vector.broadcast %50 : vector<1x128xf32> to vector<32x128xf32>
    %54 = arith.mulf %35, %53 : vector<32x128xf32>
    %55 = vector.broadcast %52 : vector<1x128xf32> to vector<32x128xf32>
    %56 = arith.addf %54, %55 : vector<32x128xf32>
    %cst_21 = arith.constant 0.000000e+00 : f32
    %57 = vector.broadcast %cst_21 : f32 to vector<32x128xf32>
    %58 = arith.maximumf %56, %57 : vector<32x128xf32>
    %c0_22 = arith.constant 0 : index
    %c0_23 = arith.constant 0 : index
    %59 = vector.load %arg14[%c0_22, %c0_23] : memref<32x128xf32, #tpu.memory_space<vmem>>, vector<32x128xf32>
    tpu.vector_store %arg14[%c0_22, %c0_23], %58 {strides = array<i32>} : memref<32x128xf32, #tpu.memory_space<vmem>>, vector<32x128xf32>,
    %c0_24 = arith.constant 0 : index
    %c0_25 = arith.constant 0 : index
    %60 = tpu.strided_load %arg14[%c0_24, %c0_25] {strides = array<i32: 2, 1>} : memref<32x128xf32, #tpu.memory_space<vmem>>, vector<16x128xf32>
    %c1 = arith.constant 1 : index
    %c0_26 = arith.constant 0 : index
    %61 = tpu.strided_load %arg14[%c1, %c0_26] {strides = array<i32: 2, 1>} : memref<32x128xf32, #tpu.memory_space<vmem>>, vector<16x128xf32>
    %62 = arith.maximumf %60, %61 : vector<16x128xf32>
    %c0_27 = arith.constant 0 : index
    %c0_28 = arith.constant 0 : index
    %63 = vector.load %arg5[%c0_27, %c0_28] : memref<384x128xf32, #tpu.memory_space<vmem>>, vector<384x128xf32>
    %c0_29 = arith.constant 0 : index
    %c0_30 = arith.constant 0 : index
    %64 = vector.load %arg6[%c0_29, %c0_30] : memref<1x128xf32, #tpu.memory_space<vmem>>, vector<1x128xf32>
    %c0_31 = arith.constant 0 : index
    %c0_32 = arith.constant 0 : index
    %65 = vector.load %arg7[%c0_31, %c0_32] : memref<1x128xf32, #tpu.memory_space<vmem>>, vector<1x128xf32>
    %c0_33 = arith.constant 0 : index
    %c0_34 = arith.constant 0 : index
    %66 = vector.load %arg8[%c0_33, %c0_34] : memref<1x128xf32, #tpu.memory_space<vmem>>, vector<1x128xf32>
    %67 = tpu.iota {dimensions = array<i32: 0>} : vector<16x128xi32>
    %c8_i32 = arith.constant 8 : i32
    %c0_i32_35 = arith.constant 0 : i32
    %68 = arith.cmpi eq, %c8_i32, %c0_i32_35 : i32
    %c1_i32_36 = arith.constant 1 : i32
    %69 = arith.select %68, %c1_i32_36, %c8_i32 : i32
    %70 = vector.broadcast %69 : i32 to vector<16x128xi32>
    %71 = arith.remsi %67, %70 : vector<16x128xi32>
    %c0_i32_37 = arith.constant 0 : i32
    %72 = vector.broadcast %c0_i32_37 : i32 to vector<16x128xi32>
    %73 = arith.cmpi ne, %71, %72 : vector<16x128xi32>
    %c0_i32_38 = arith.constant 0 : i32
    %74 = vector.broadcast %c0_i32_38 : i32 to vector<16x128xi32>
    %75 = arith.cmpi slt, %71, %74 : vector<16x128xi32>
    %c0_i32_39 = arith.constant 0 : i32
    %76 = arith.cmpi slt, %69, %c0_i32_39 : i32
    %77 = vector.broadcast %76 : i1 to vector<16x128xi1>
    %78 = vector.broadcast %77 : vector<16x128xi1> to vector<16x128xi1>
    %79 = arith.xori %75, %78 : vector<16x128xi1>
    %80 = arith.andi %79, %73 : vector<16x128xi1>
    %81 = vector.broadcast %69 : i32 to vector<16x128xi32>
    %82 = arith.addi %71, %81 : vector<16x128xi32>
    %83 = arith.select %80, %82, %71 : vector<16x128xi1>, vector<16x128xi32>
    %c0_i32_40 = arith.constant 0 : i32
    %84 = vector.broadcast %c0_i32_40 : i32 to vector<16x128xi32>
    %85 = arith.cmpi eq, %83, %84 : vector<16x128xi32>
    %c1_i32_41 = arith.constant 1 : i32
    %86 = tpu.dynamic_rotate %62 by %c1_i32_41 dim 0 : vector<16x128xf32>, i32 -> vector<16x128xf32>
    %cst_42 = arith.constant 0.000000e+00 : f32
    %87 = vector.broadcast %cst_42 : f32 to vector<16x128xf32>
    %88 = arith.select %85, %87, %86 : vector<16x128xi1>, vector<16x128xf32>
    %c7_i32 = arith.constant 7 : i32
    %89 = vector.broadcast %c7_i32 : i32 to vector<16x128xi32>
    %90 = arith.cmpi eq, %83, %89 : vector<16x128xi32>
    %c15_i32_43 = arith.constant 15 : i32
    %91 = tpu.dynamic_rotate %62 by %c15_i32_43 dim 0 : vector<16x128xf32>, i32 -> vector<16x128xf32>
    %cst_44 = arith.constant 0.000000e+00 : f32
    %92 = vector.broadcast %cst_44 : f32 to vector<16x128xf32>
    %93 = arith.select %90, %92, %91 : vector<16x128xi1>, vector<16x128xf32>
    %94 = tpu.concatenate %88, %62, %93 in 1 : vector<16x128xf32>, vector<16x128xf32>, vector<16x128xf32> -> vector<16x384xf32>
    %cst_45 = arith.constant dense<0.000000e+00> : vector<16x128xf32>
    %95 = tpu.matmul %94, %63, %cst_45 {dimension_numbers = #tpu.dot_dimension_numbers<[1], [0], [0], [1], [0, 0, 1, 1], [], []>} : vector<16x384xf32>, vector<384x128xf32>, vector<16x128xf32> -> vector<16x128xf32>
    %96 = vector.broadcast %64 : vector<1x128xf32> to vector<16x128xf32>
    %97 = arith.addf %95, %96 : vector<16x128xf32>
    %cst_46 = arith.constant dense<0.000000e+00> : vector<128xf32>
    %98 = vector.multi_reduction <add>, %97, %cst_46 [0] : vector<16x128xf32> to vector<128xf32>
    %99 = vector.shape_cast %98 : vector<128xf32> to vector<1x128xf32>
    %cst_47 = arith.constant 1.600000e+01 : f32
    %100 = vector.broadcast %cst_47 : f32 to vector<1x128xf32>
    %101 = arith.divf %99, %100 : vector<1x128xf32>
    %102 = vector.broadcast %101 : vector<1x128xf32> to vector<16x128xf32>
    %103 = arith.subf %97, %102 : vector<16x128xf32>
    %104 = arith.mulf %103, %103 : vector<16x128xf32>
    %cst_48 = arith.constant dense<0.000000e+00> : vector<128xf32>
    %105 = vector.multi_reduction <add>, %104, %cst_48 [0] : vector<16x128xf32> to vector<128xf32>
    %106 = vector.shape_cast %105 : vector<128xf32> to vector<1x128xf32>
    %cst_49 = arith.constant 1.600000e+01 : f32
    %107 = vector.broadcast %cst_49 : f32 to vector<1x128xf32>
    %108 = arith.divf %106, %107 : vector<1x128xf32>
    %cst_50 = arith.constant 9.99999974E-6 : f32
    %109 = vector.broadcast %cst_50 : f32 to vector<1x128xf32>
    %110 = arith.addf %108, %109 : vector<1x128xf32>
    %111 = math.rsqrt %110 : vector<1x128xf32>
    %112 = arith.mulf %111, %65 : vector<1x128xf32>
    %113 = arith.mulf %101, %112 : vector<1x128xf32>
    %114 = arith.subf %66, %113 : vector<1x128xf32>
    %115 = vector.broadcast %112 : vector<1x128xf32> to vector<16x128xf32>
    %116 = arith.mulf %97, %115 : vector<16x128xf32>
    %117 = vector.broadcast %114 : vector<1x128xf32> to vector<16x128xf32>
    %118 = arith.addf %116, %117 : vector<16x128xf32>
    %cst_51 = arith.constant 0.000000e+00 : f32
    %119 = vector.broadcast %cst_51 : f32 to vector<16x128xf32>
    %120 = arith.maximumf %118, %119 : vector<16x128xf32>
    %c0_52 = arith.constant 0 : index
    %c0_53 = arith.constant 0 : index
    %121 = vector.load %arg15[%c0_52, %c0_53] : memref<16x128xf32, #tpu.memory_space<vmem>>, vector<16x128xf32>
    tpu.vector_store %arg15[%c0_52, %c0_53], %120 {strides = array<i32>} : memref<16x128xf32, #tpu.memory_space<vmem>>, vector<16x128xf32>,
    %c0_54 = arith.constant 0 : index
    %c0_55 = arith.constant 0 : index
    %122 = tpu.strided_load %arg15[%c0_54, %c0_55] {strides = array<i32: 2, 1>} : memref<16x128xf32, #tpu.memory_space<vmem>>, vector<8x128xf32>
    %c1_56 = arith.constant 1 : index
    %c0_57 = arith.constant 0 : index
    %123 = tpu.strided_load %arg15[%c1_56, %c0_57] {strides = array<i32: 2, 1>} : memref<16x128xf32, #tpu.memory_space<vmem>>, vector<8x128xf32>
    %124 = arith.maximumf %122, %123 : vector<8x128xf32>
    %125 = vector.shape_cast %124 : vector<8x128xf32> to vector<2x4x128xf32>
    %cst_58 = arith.constant dense<0.000000e+00> : vector<2x128xf32>
    %126 = vector.multi_reduction <add>, %125, %cst_58 [1] : vector<2x4x128xf32> to vector<2x128xf32>
    %c0_59 = arith.constant 0 : index
    %c0_60 = arith.constant 0 : index
    %127 = vector.load %arg9[%c0_59, %c0_60] : memref<128x128xf32, #tpu.memory_space<vmem>>, vector<128x128xf32>
    %cst_61 = arith.constant dense<0.000000e+00> : vector<2x128xf32>
    %128 = tpu.matmul %126, %127, %cst_61 {dimension_numbers = #tpu.dot_dimension_numbers<[1], [0], [0], [1], [0, 0, 1, 1], [], []>} : vector<2x128xf32>, vector<128x128xf32>, vector<2x128xf32> -> vector<2x128xf32>
    %c0_62 = arith.constant 0 : index
    %c0_63 = arith.constant 0 : index
    %129 = vector.load %arg10[%c0_62, %c0_63] : memref<1x128xf32, #tpu.memory_space<vmem>>, vector<1x128xf32>
    %130 = vector.broadcast %129 : vector<1x128xf32> to vector<2x128xf32>
    %131 = arith.addf %128, %130 : vector<2x128xf32>
    %cst_64 = arith.constant 0.000000e+00 : f32
    %132 = vector.broadcast %cst_64 : f32 to vector<2x128xf32>
    %133 = arith.maximumf %131, %132 : vector<2x128xf32>
    %c0_65 = arith.constant 0 : index
    %c0_66 = arith.constant 0 : index
    %134 = vector.load %arg11[%c0_65, %c0_66] : memref<128x128xf32, #tpu.memory_space<vmem>>, vector<128x128xf32>
    %cst_67 = arith.constant dense<0.000000e+00> : vector<2x128xf32>
    %135 = tpu.matmul %133, %134, %cst_67 {dimension_numbers = #tpu.dot_dimension_numbers<[1], [0], [0], [1], [0, 0, 1, 1], [], []>} : vector<2x128xf32>, vector<128x128xf32>, vector<2x128xf32> -> vector<2x128xf32>
    %c0_68 = arith.constant 0 : index
    %c0_69 = arith.constant 0 : index
    %136 = vector.load %arg12[%c0_68, %c0_69] : memref<1x128xf32, #tpu.memory_space<vmem>>, vector<1x128xf32>
    %137 = vector.broadcast %136 : vector<1x128xf32> to vector<2x128xf32>
    %138 = arith.addf %135, %137 : vector<2x128xf32>
    %139 = arith.negf %138 : vector<2x128xf32>
    %140 = math.exp %139 : vector<2x128xf32>
    %cst_70 = arith.constant 1.000000e+00 : f32
    %141 = vector.broadcast %cst_70 : f32 to vector<2x128xf32>
    %142 = arith.addf %141, %140 : vector<2x128xf32>
    %143 = arith.divf %141, %142 : vector<2x128xf32>
    %c0_71 = arith.constant 0 : index
    %c0_72 = arith.constant 0 : index
    %144 = vector.load %arg13[%c0_71, %c0_72] : memref<2x128xf32, #tpu.memory_space<vmem>>, vector<2x128xf32>
    tpu.vector_store %arg13[%c0_71, %c0_72], %143 {strides = array<i32>} : memref<2x128xf32, #tpu.memory_space<vmem>>, vector<2x128xf32>,
    return
  }
}

</mosaic_0001>

<llo_original>
// kernel: tpu_custom_call.1
$region0: #{tpu_custom_call.1}
  #allocation0 [shape = 'u32[]', space=smem, size = 0x4, offset = 0x4, fixed_abs, tag = 'smem constant byte address 0x4 - core index']
  #allocation1 [shape = 'u32[144,128]{1,0:T(1,128)}', space=vmem, size = 0x12000, scoped, tag = 'internal scratch']
  #allocation2 [shape = 'f32[32,128]{1,0:T(8,128)}', space=vmem, size = 0x4000, scoped, tag = 'scratch operand']
  #allocation3 [shape = 'f32[16,128]{1,0:T(8,128)}', space=vmem, size = 0x2000, scoped, tag = 'scratch operand']
  %s0 = inlined_call_operand.hbm [shape: f32[32,128], index: 0, kind: input, shape index: {}]
  %s1 = inlined_call_operand.hbm [shape: f32[384,128], index: 1, kind: input, shape index: {}]
  %s2 = inlined_call_operand.vmem [shape: f32[1,128], index: 2, kind: input, shape index: {}]
  %s3 = inlined_call_operand.vmem [shape: f32[1,128], index: 3, kind: input, shape index: {}]
  %s4 = inlined_call_operand.vmem [shape: f32[1,128], index: 4, kind: input, shape index: {}]
  %s5 = inlined_call_operand.hbm [shape: f32[384,128], index: 5, kind: input, shape index: {}]
  %s6 = inlined_call_operand.vmem [shape: f32[1,128], index: 6, kind: input, shape index: {}]
  %s7 = inlined_call_operand.vmem [shape: f32[1,128], index: 7, kind: input, shape index: {}]
  %s8 = inlined_call_operand.vmem [shape: f32[1,128], index: 8, kind: input, shape index: {}]
  %s9 = inlined_call_operand.hbm [shape: f32[128,128], index: 9, kind: input, shape index: {}]
  %s10 = inlined_call_operand.vmem [shape: f32[1,128], index: 10, kind: input, shape index: {}]
  %s11 = inlined_call_operand.hbm [shape: f32[128,128], index: 11, kind: input, shape index: {}]
  %s12 = inlined_call_operand.vmem [shape: f32[1,128], index: 12, kind: input, shape index: {}]
  %s13 = inlined_call_operand.hbm [shape: f32[2,128], index: 13, kind: output, shape index: {}]
  %s14 = sld [smem:[#allocation0]]
  $region82: #{tpu_custom_call.1} parent=0
    _
  %s16 = ssub.s32 1, %s14
  %s17 = scalar_select 0, %s16, %s14
  $region1: #{tpu_custom_call.1} parent=0
    #allocation4 [shape = 'u8[16384]{0}', space=vmem, size = 0x4000, scoped, tag = 'input window, operand 0, single buffered']
    #allocation5 [shape = 's32[1]{0}', space=sflag, size = 0x4, scoped, tag = 'scoped memory for tpu_custom_call.1']
    #allocation6 [shape = 's32[1]{0}', space=sflag, size = 0x4, scoped, tag = 'scoped memory for tpu_custom_call.1']
    #allocation7 [shape = 'u8[196608]{0}', space=vmem, size = 0x30000, scoped, tag = 'input window, operand 1, single buffered']
    #allocation8 [shape = 's32[1]{0}', space=sflag, size = 0x4, scoped, tag = 'scoped memory for tpu_custom_call.1']
    #allocation9 [shape = 'u8[196608]{0}', space=vmem, size = 0x30000, scoped, tag = 'input window, operand 5, single buffered']
    #allocation10 [shape = 'u8[65536]{0}', space=vmem, size = 0x10000, scoped, tag = 'input window, operand 9, single buffered']
    #allocation11 [shape = 's32[1]{0}', space=sflag, size = 0x4, scoped, tag = 'scoped memory for tpu_custom_call.1']
    #allocation12 [shape = 'u8[65536]{0}', space=vmem, size = 0x10000, scoped, tag = 'input window, operand 11, single buffered']
    #allocation13 [shape = 'u8[1024]{0}', space=vmem, size = 0x400, scoped, tag = 'output window, operand 0, single buffered']
    %18 = vsyncpa [#allocation5], 0
    %19 = vsyncpa [#allocation8], 0
    %20 = vsyncpa [#allocation11], 0
    %21 = vsyncpa [#allocation6], 0
    // Predicated region
    $region2: #{tpu_custom_call.1} parent=1 // pred_check
      _
    $region3: #{tpu_custom_call.1} parent=1 // pred_check_branch
      %23 = sbr.rel (0) target = $region5
    $region4: #{tpu_custom_call.1} parent=1 // pred_region
      %s25 = ssub.s32 512, 512
      %26 = vsyncadd [#allocation5], %s25
      %s27 = sshll.u32 [#allocation4], 4
      %s28 = int_to_ptr.vmem [resolvable:$true] %s27
      %33 = dma.hbm_to_vmem [thread:$0]  %s0, 512, %s28, [#allocation5], 128, 128, 8
    $region5: #{tpu_custom_call.1} parent=1 // pred_fallthru
      _
    // Predicated region
    $region6: #{tpu_custom_call.1} parent=1 // pred_check
      _
    $region7: #{tpu_custom_call.1} parent=1 // pred_check_branch
      %35 = sbr.rel (0) target = $region9
    $region8: #{tpu_custom_call.1} parent=1 // pred_region
      %s37 = ssub.s32 6144, 6144
      %38 = vsyncadd [#allocation8], %s37
      %s39 = sshll.u32 [#allocation7], 4
      %s40 = int_to_ptr.vmem [resolvable:$true] %s39
      %45 = dma.hbm_to_vmem [thread:$0]  %s1, 6144, %s40, [#allocation8], 128, 128, 8
    $region9: #{tpu_custom_call.1} parent=1 // pred_fallthru
      _
    // Predicated region
    $region10: #{tpu_custom_call.1} parent=1 // pred_check
      _
    $region11: #{tpu_custom_call.1} parent=1 // pred_check_branch
      %47 = sbr.rel (0) target = $region13
    $region12: #{tpu_custom_call.1} parent=1 // pred_region
      _
    $region13: #{tpu_custom_call.1} parent=1 // pred_fallthru
      _
    // Predicated region
    $region14: #{tpu_custom_call.1} parent=1 // pred_check
      _
    $region15: #{tpu_custom_call.1} parent=1 // pred_check_branch
      %49 = sbr.rel (0) target = $region17
    $region16: #{tpu_custom_call.1} parent=1 // pred_region
      _
    $region17: #{tpu_custom_call.1} parent=1 // pred_fallthru
      _
    // Predicated region
    $region18: #{tpu_custom_call.1} parent=1 // pred_check
      _
    $region19: #{tpu_custom_call.1} parent=1 // pred_check_branch
      %51 = sbr.rel (0) target = $region21
    $region20: #{tpu_custom_call.1} parent=1 // pred_region
      _
    $region21: #{tpu_custom_call.1} parent=1 // pred_fallthru
      _
    // Predicated region
    $region22: #{tpu_custom_call.1} parent=1 // pred_check
      _
    $region23: #{tpu_custom_call.1} parent=1 // pred_check_branch
      %53 = sbr.rel (0) target = $region25
    $region24: #{tpu_custom_call.1} parent=1 // pred_region
      %s55 = ssub.s32 6144, 6144
      %56 = vsyncadd [#allocation8], %s55
      %s57 = sshll.u32 [#allocation9], 4
      %s58 = int_to_ptr.vmem [resolvable:$true] %s57
      %63 = dma.hbm_to_vmem [thread:$0]  %s5, 6144, %s58, [#allocation8], 128, 128, 8
    $region25: #{tpu_custom_call.1} parent=1 // pred_fallthru
      _
    // Predicated region
    $region26: #{tpu_custom_call.1} parent=1 // pred_check
      _
    $region27: #{tpu_custom_call.1} parent=1 // pred_check_branch
      %65 = sbr.rel (0) target = $region29
    $region28: #{tpu_custom_call.1} parent=1 // pred_region
      _
    $region29: #{tpu_custom_call.1} parent=1 // pred_fallthru
      _
    // Predicated region
    $region30: #{tpu_custom_call.1} parent=1 // pred_check
      _
    $region31: #{tpu_custom_call.1} parent=1 // pred_check_branch
      %67 = sbr.rel (0) target = $region33
    $region32: #{tpu_custom_call.1} parent=1 // pred_region
      _
    $region33: #{tpu_custom_call.1} parent=1 // pred_fallthru
      _
    // Predicated region
    $region34: #{tpu_custom_call.1} parent=1 // pred_check
      _
    $region35: #{tpu_custom_call.1} parent=1 // pred_check_branch
      %69 = sbr.rel (0) target = $region37
    $region36: #{tpu_custom_call.1} parent=1 // pred_region
      _
    $region37: #{tpu_custom_call.1} parent=1 // pred_fallthru
      _
    // Predicated region
    $region38: #{tpu_custom_call.1} parent=1 // pred_check
      _
    $region39: #{tpu_custom_call.1} parent=1 // pred_check_branch
      %71 = sbr.rel (0) target = $region41
    $region40: #{tpu_custom_call.1} parent=1 // pred_region
      %s73 = ssub.s32 2048, 2048
      %74 = vsyncadd [#allocation11], %s73
      %s75 = sshll.u32 [#allocation10], 4
      %s76 = int_to_ptr.vmem [resolvable:$true] %s75
      %81 = dma.hbm_to_vmem [thread:$0]  %s9, 2048, %s76, [#allocation11], 128, 128, 8
    $region41: #{tpu_custom_call.1} parent=1 // pred_fallthru
      _
    // Predicated region
    $region42: #{tpu_custom_call.1} parent=1 // pred_check
      _
    $region43: #{tpu_custom_call.1} parent=1 // pred_check_branch
      %83 = sbr.rel (0) target = $region45
    $region44: #{tpu_custom_call.1} parent=1 // pred_region
      _
    $region45: #{tpu_custom_call.1} parent=1 // pred_fallthru
      _
    // Predicated region
    $region46: #{tpu_custom_call.1} parent=1 // pred_check
      _
    $region47: #{tpu_custom_call.1} parent=1 // pred_check_branch
      %85 = sbr.rel (0) target = $region49
    $region48: #{tpu_custom_call.1} parent=1 // pred_region
      %s87 = ssub.s32 2048, 2048
      %88 = vsyncadd [#allocation11], %s87
      %s89 = sshll.u32 [#allocation12], 4
      %s90 = int_to_ptr.vmem [resolvable:$true] %s89
      %95 = dma.hbm_to_vmem [thread:$0]  %s11, 2048, %s90, [#allocation11], 128, 128, 8
    $region49: #{tpu_custom_call.1} parent=1 // pred_fallthru
      _
    // Predicated region
    $region50: #{tpu_custom_call.1} parent=1 // pred_check
      _
    $region51: #{tpu_custom_call.1} parent=1 // pred_check_branch
      %97 = sbr.rel (0) target = $region53
    $region52: #{tpu_custom_call.1} parent=1 // pred_region
      _
    $region53: #{tpu_custom_call.1} parent=1 // pred_fallthru
      _
    // Predicated region
    $region54: #{tpu_custom_call.1} parent=1 // pred_check
      _
    $region55: #{tpu_custom_call.1} parent=1 // pred_check_branch
      %99 = sbr.rel (0) target = $region57
    $region56: #{tpu_custom_call.1} parent=1 // pred_region
      %100 = dma.done [#allocation5], 512
    $region57: #{tpu_custom_call.1} parent=1 // pred_fallthru
      _
    // Predicated region
    $region58: #{tpu_custom_call.1} parent=1 // pred_check
      _
    $region59: #{tpu_custom_call.1} parent=1 // pred_check_branch
      %102 = sbr.rel (0) target = $region61
    $region60: #{tpu_custom_call.1} parent=1 // pred_region
      %103 = dma.done [#allocation8], 6144
    $region61: #{tpu_custom_call.1} parent=1 // pred_fallthru
      _
    // Predicated region
    $region62: #{tpu_custom_call.1} parent=1 // pred_check
      _
    $region63: #{tpu_custom_call.1} parent=1 // pred_check_branch
      %105 = sbr.rel (0) target = $region65
    $region64: #{tpu_custom_call.1} parent=1 // pred_region
      %106 = dma.done [#allocation8], 6144
    $region65: #{tpu_custom_call.1} parent=1 // pred_fallthru
      _
    // Predicated region
    $region66: #{tpu_custom_call.1} parent=1 // pred_check
      _
    $region67: #{tpu_custom_call.1} parent=1 // pred_check_branch
      %108 = sbr.rel (0) target = $region69
    $region68: #{tpu_custom_call.1} parent=1 // pred_region
      %109 = dma.done [#allocation11], 2048
    $region69: #{tpu_custom_call.1} parent=1 // pred_fallthru
      _
    // Predicated region
    $region70: #{tpu_custom_call.1} parent=1 // pred_check
      _
    $region71: #{tpu_custom_call.1} parent=1 // pred_check_branch
      %111 = sbr.rel (0) target = $region73
    $region72: #{tpu_custom_call.1} parent=1 // pred_region
      %112 = dma.done [#allocation11], 2048
    $region73: #{tpu_custom_call.1} parent=1 // pred_fallthru
      _
    %v113 = vld [vmem:[#allocation4] sm:$0xff]
    %v114 = vld [vmem:[#allocation4 + $0x8] sm:$0xff]
    %v115 = vld [vmem:[#allocation4 + $0x10] sm:$0xff]
    %v116 = vld [vmem:[#allocation4 + $0x18] sm:$0xff]
    %v117 = vld [vmem:[#allocation7] sm:$0xff]
    %v118 = vld [vmem:[#allocation7 + $0x8] sm:$0xff]
    %v119 = vld [vmem:[#allocation7 + $0x10] sm:$0xff]
    %v120 = vld [vmem:[#allocation7 + $0x18] sm:$0xff]
    %v121 = vld [vmem:[#allocation7 + $0x20] sm:$0xff]
    %v122 = vld [vmem:[#allocation7 + $0x28] sm:$0xff]
    %v123 = vld [vmem:[#allocation7 + $0x30] sm:$0xff]
    %v124 = vld [vmem:[#allocation7 + $0x38] sm:$0xff]
    %v125 = vld [vmem:[#allocation7 + $0x40] sm:$0xff]
    %v126 = vld [vmem:[#allocation7 + $0x48] sm:$0xff]
    %v127 = vld [vmem:[#allocation7 + $0x50] sm:$0xff]
    %v128 = vld [vmem:[#allocation7 + $0x58] sm:$0xff]
    %v129 = vld [vmem:[#allocation7 + $0x60] sm:$0xff]
    %v130 = vld [vmem:[#allocation7 + $0x68] sm:$0xff]
    %v131 = vld [vmem:[#allocation7 + $0x70] sm:$0xff]
    %v132 = vld [vmem:[#allocation7 + $0x78] sm:$0xff]
    %v133 = vld [vmem:[#allocation7 + $0x80] sm:$0xff]
    %v134 = vld [vmem:[#allocation7 + $0x88] sm:$0xff]
    %v135 = vld [vmem:[#allocation7 + $0x90] sm:$0xff]
    %v136 = vld [vmem:[#allocation7 + $0x98] sm:$0xff]
    %v137 = vld [vmem:[#allocation7 + $0xa0] sm:$0xff]
    %v138 = vld [vmem:[#allocation7 + $0xa8] sm:$0xff]
    %v139 = vld [vmem:[#allocation7 + $0xb0] sm:$0xff]
    %v140 = vld [vmem:[#allocation7 + $0xb8] sm:$0xff]
    %v141 = vld [vmem:[#allocation7 + $0xc0] sm:$0xff]
    %v142 = vld [vmem:[#allocation7 + $0xc8] sm:$0xff]
    %v143 = vld [vmem:[#allocation7 + $0xd0] sm:$0xff]
    %v144 = vld [vmem:[#allocation7 + $0xd8] sm:$0xff]
    %v145 = vld [vmem:[#allocation7 + $0xe0] sm:$0xff]
    %v146 = vld [vmem:[#allocation7 + $0xe8] sm:$0xff]
    %v147 = vld [vmem:[#allocation7 + $0xf0] sm:$0xff]
    %v148 = vld [vmem:[#allocation7 + $0xf8] sm:$0xff]
    %v149 = vld [vmem:[#allocation7 + $0x100] sm:$0xff]
    %v150 = vld [vmem:[#allocation7 + $0x108] sm:$0xff]
    %v151 = vld [vmem:[#allocation7 + $0x110] sm:$0xff]
    %v152 = vld [vmem:[#allocation7 + $0x118] sm:$0xff]
    %v153 = vld [vmem:[#allocation7 + $0x120] sm:$0xff]
    %v154 = vld [vmem:[#allocation7 + $0x128] sm:$0xff]
    %v155 = vld [vmem:[#allocation7 + $0x130] sm:$0xff]
    %v156 = vld [vmem:[#allocation7 + $0x138] sm:$0xff]
    %v157 = vld [vmem:[#allocation7 + $0x140] sm:$0xff]
    %v158 = vld [vmem:[#allocation7 + $0x148] sm:$0xff]
    %v159 = vld [vmem:[#allocation7 + $0x150] sm:$0xff]
    %v160 = vld [vmem:[#allocation7 + $0x158] sm:$0xff]
    %v161 = vld [vmem:[#allocation7 + $0x160] sm:$0xff]
    %v162 = vld [vmem:[#allocation7 + $0x168] sm:$0xff]
    %v163 = vld [vmem:[#allocation7 + $0x170] sm:$0xff]
    %v164 = vld [vmem:[#allocation7 + $0x178] sm:$0xff]
    %v165 = vld [vmem:[%s2] sm:$0x1]
    %v166 = vld [vmem:[%s3] sm:$0x1]
    %v167 = vld [vmem:[%s4] sm:$0x1]
    %v168 = vlaneseq
    %v169 = vshrl.u32 %v168, 7
    %v170 = vadd.s32 %v169, 8
    %v171 = vadd.s32 %v169, 16
    %v172 = vadd.s32 %v169, 24
    %vm173 = vcmp.lt.s32.totalorder %v169, 0
    %v174 = vsub.s32 0, %v169
    %v175 = vsel %vm173, %v174, %v169
    %v176 = vshrl.u32 %v175, 4
    %v177 = vand.u32 %v175, 15
    %v178 = vsub.s32 0, %v177
    %v179 = vsel %vm173, %v178, %v177
    %vm180 = vcmp.lt.s32.totalorder %v170, 0
    %v181 = vsub.s32 0, %v170
    %v182 = vsel %vm180, %v181, %v170
    %v183 = vshrl.u32 %v182, 4
    %v184 = vand.u32 %v182, 15
    %v185 = vsub.s32 0, %v184
    %v186 = vsel %vm180, %v185, %v184
    %vm187 = vcmp.lt.s32.totalorder %v171, 0
    %v188 = vsub.s32 0, %v171
    %v189 = vsel %vm187, %v188, %v171
    %v190 = vshrl.u32 %v189, 4
    %v191 = vand.u32 %v189, 15
    %v192 = vsub.s32 0, %v191
    %v193 = vsel %vm187, %v192, %v191
    %vm194 = vcmp.lt.s32.totalorder %v172, 0
    %v195 = vsub.s32 0, %v172
    %v196 = vsel %vm194, %v195, %v172
    %v197 = vshrl.u32 %v196, 4
    %v198 = vand.u32 %v196, 15
    %v199 = vsub.s32 0, %v198
    %v200 = vsel %vm194, %v199, %v198
    %vm201 = vcmp.ne.s32.totalorder %v179, 0
    %vm202 = vcmp.ne.s32.totalorder %v186, 0
    %vm203 = vcmp.ne.s32.totalorder %v193, 0
    %vm204 = vcmp.ne.s32.totalorder %v200, 0
    %vm205 = vcmp.lt.s32.totalorder %v179, 0
    %vm206 = vcmp.lt.s32.totalorder %v186, 0
    %vm207 = vcmp.lt.s32.totalorder %v193, 0
    %vm208 = vcmp.lt.s32.totalorder %v200, 0
    %vm209 = vmand %vm205, %vm201
    %vm210 = vmand %vm206, %vm202
    %vm211 = vmand %vm207, %vm203
    %vm212 = vmand %vm208, %vm204
    %v213 = vadd.s32 %v179, 16
    %v214 = vadd.s32 %v186, 16
    %v215 = vadd.s32 %v193, 16
    %v216 = vadd.s32 %v200, 16
    %v217 = vsel %vm209, %v213, %v179
    %v218 = vsel %vm210, %v214, %v186
    %v219 = vsel %vm211, %v215, %v193
    %v220 = vsel %vm212, %v216, %v200
    %vm221 = vcmp.eq.s32.totalorder %v217, 0
    %vm222 = vcmp.eq.s32.totalorder %v218, 0
    %vm223 = vcmp.eq.s32.totalorder %v219, 0
    %vm224 = vcmp.eq.s32.totalorder %v220, 0
    %v225 = vrot.slane %v113, 7
    %v226 = vrot.slane %v114, 7
    %v227 = vrot.slane %v115, 7
    %v228 = vrot.slane %v116, 7
    %vm229 = vcmp.lt.s32.totalorder %v169, 1
    %v230 = vsel %vm229, %v227, %v228
    %v231 = vsel %vm229, %v226, %v227
    %v232 = vsel %vm229, %v225, %v226
    %v233 = vsel %vm229, %v228, %v225
    %v234 = vsel %vm221, 0.0, %v233
    %v235 = vsel %vm222, 0.0, %v232
    %v236 = vsel %vm223, 0.0, %v231
    %v237 = vsel %vm224, 0.0, %v230
    %vm238 = vcmp.eq.s32.totalorder %v217, 15
    %vm239 = vcmp.eq.s32.totalorder %v218, 15
    %vm240 = vcmp.eq.s32.totalorder %v219, 15
    %vm241 = vcmp.eq.s32.totalorder %v220, 15
    %v242 = vrot.slane %v113, 1
    %v243 = vrot.slane %v114, 1
    %v244 = vrot.slane %v115, 1
    %v245 = vrot.slane %v116, 1
    %vm246 = vcmp.lt.s32.totalorder %v169, 7
    %v247 = vsel %vm246, %v244, %v245
    %v248 = vsel %vm246, %v243, %v244
    %v249 = vsel %vm246, %v242, %v243
    %v250 = vsel %vm246, %v245, %v242
    %v251 = vsel %vm238, 0.0, %v249
    %v252 = vsel %vm239, 0.0, %v248
    %v253 = vsel %vm240, 0.0, %v247
    %v254 = vsel %vm241, 0.0, %v250
    %v256 = vlaneseq
    %v257 = vshrl.u32 %v256, 7
    %v258 = vsub.s32 0, %v257
    %v259 = vrot.slane %v165, %v258
    %261 = vmatprep.subr.mxu0 0.0
    %262 = vmatpush1.msra.mxu0 %v132
    %263 = vmatprep.subr.mxu0 0.0
    %264 = vmatpush1.msra.mxu0 %v131
    %265 = vmatprep.subr.mxu0 0.0
    %266 = vmatpush1.msra.mxu0 %v130
    %267 = vmatprep.subr.mxu0 0.0
    %268 = vmatpush1.msra.mxu0 %v129
    %269 = vmatprep.subr.mxu0 0.0
    %270 = vmatpush1.msra.mxu0 %v128
    %271 = vmatprep.subr.mxu0 0.0
    %272 = vmatpush1.msra.mxu0 %v127
    %273 = vmatprep.subr.mxu0 0.0
    %274 = vmatpush1.msra.mxu0 %v126
    %275 = vmatprep.subr.mxu0 0.0
    %276 = vmatpush1.msra.mxu0 %v125
    %277 = vmatprep.subr.mxu0 0.0
    %278 = vmatpush1.msra.mxu0 %v124
    %279 = vmatprep.subr.mxu0 0.0
    %280 = vmatpush1.msra.mxu0 %v123
    %281 = vmatprep.subr.mxu0 0.0
    %282 = vmatpush1.msra.mxu0 %v122
    %283 = vmatprep.subr.mxu0 0.0
    %284 = vmatpush1.msra.mxu0 %v121
    %285 = vmatprep.subr.mxu0 0.0
    %286 = vmatpush1.msra.mxu0 %v120
    %287 = vmatprep.subr.mxu0 0.0
    %288 = vmatpush1.msra.mxu0 %v119
    %289 = vmatprep.subr.mxu0 0.0
    %290 = vmatpush1.msra.mxu0 %v118
    %291 = vmatprep.subr.mxu0 0.0
    %292 = vmatpush1.msra.mxu0 %v117
    %293 = vmatprep.subr.mxu0 0.0
    %294 = vmatpush2.msra.mxu0 %v148
    %295 = vmatprep.subr.mxu0 0.0
    %296 = vmatpush2.msra.mxu0 %v147
    %297 = vmatprep.subr.mxu0 0.0
    %298 = vmatpush2.msra.mxu0 %v146
    %299 = vmatprep.subr.mxu0 0.0
    %300 = vmatpush2.msra.mxu0 %v145
    %301 = vmatprep.subr.mxu0 0.0
    %302 = vmatpush2.msra.mxu0 %v144
    %303 = vmatprep.subr.mxu0 0.0
    %304 = vmatpush2.msra.mxu0 %v143
    %305 = vmatprep.subr.mxu0 0.0
    %306 = vmatpush2.msra.mxu0 %v142
    %307 = vmatprep.subr.mxu0 0.0
    %308 = vmatpush2.msra.mxu0 %v141
    %309 = vmatprep.subr.mxu0 0.0
    %310 = vmatpush2.msra.mxu0 %v140
    %311 = vmatprep.subr.mxu0 0.0
    %312 = vmatpush2.msra.mxu0 %v139
    %313 = vmatprep.subr.mxu0 0.0
    %314 = vmatpush2.msra.mxu0 %v138
    %315 = vmatprep.subr.mxu0 0.0
    %316 = vmatpush2.msra.mxu0 %v137
    %317 = vmatprep.subr.mxu0 0.0
    %318 = vmatpush2.msra.mxu0 %v136
    %319 = vmatprep.subr.mxu0 0.0
    %320 = vmatpush2.msra.mxu0 %v135
    %321 = vmatprep.subr.mxu0 0.0
    %322 = vmatpush2.msra.mxu0 %v134
    %323 = vmatprep.subr.mxu0 0.0
    %324 = vmatpush2.msra.mxu0 %v133
    %325 = vmatprep.mubr.f32.mxu0 %v113
    %326 = vmatmul.mubr.f32.gmra.mxu0 %v234
    %v327 = vpop.f32.mrf.mxu0
    %v328 = vadd.f32 %v259, %v327
    %v329 = vpop.f32.mrf.mxu0
    %330 = vmatprep.mubr.f32.mxu0 %v114
    %331 = vmatmul.mubr.f32.gmra.mxu0 %v235
    %v332 = vpop.f32.mrf.mxu0
    %v333 = vadd.f32 %v259, %v332
    %v334 = vpop.f32.mrf.mxu0
    %335 = vmatprep.mubr.f32.mxu0 %v115
    %336 = vmatmul.mubr.f32.gmra.mxu0 %v236
    %v337 = vpop.f32.mrf.mxu0
    %v338 = vadd.f32 %v259, %v337
    %v339 = vpop.f32.mrf.mxu0
    %340 = vmatprep.mubr.f32.mxu0 %v116
    %341 = vmatmul.mubr.f32.gmra.mxu0 %v237
    %v342 = vpop.f32.mrf.mxu0
    %v343 = vadd.f32 %v259, %v342
    %v344 = vpop.f32.mrf.mxu0
    %345 = vdwg.mxu0
    %346 = vmatprep.subr.mxu0 0.0
    %347 = vmatpush1.msra.mxu0 %v164
    %348 = vmatprep.subr.mxu0 0.0
    %349 = vmatpush1.msra.mxu0 %v163
    %350 = vmatprep.subr.mxu0 0.0
    %351 = vmatpush1.msra.mxu0 %v162
    %352 = vmatprep.subr.mxu0 0.0
    %353 = vmatpush1.msra.mxu0 %v161
    %354 = vmatprep.subr.mxu0 0.0
    %355 = vmatpush1.msra.mxu0 %v160
    %356 = vmatprep.subr.mxu0 0.0
    %357 = vmatpush1.msra.mxu0 %v159
    %358 = vmatprep.subr.mxu0 0.0
    %359 = vmatpush1.msra.mxu0 %v158
    %360 = vmatprep.subr.mxu0 0.0
    %361 = vmatpush1.msra.mxu0 %v157
    %362 = vmatprep.subr.mxu0 0.0
    %363 = vmatpush1.msra.mxu0 %v156
    %364 = vmatprep.subr.mxu0 0.0
    %365 = vmatpush1.msra.mxu0 %v155
    %366 = vmatprep.subr.mxu0 0.0
    %367 = vmatpush1.msra.mxu0 %v154
    %368 = vmatprep.subr.mxu0 0.0
    %369 = vmatpush1.msra.mxu0 %v153
    %370 = vmatprep.subr.mxu0 0.0
    %371 = vmatpush1.msra.mxu0 %v152
    %372 = vmatprep.subr.mxu0 0.0
    %373 = vmatpush1.msra.mxu0 %v151
    %374 = vmatprep.subr.mxu0 0.0
    %375 = vmatpush1.msra.mxu0 %v150
    %376 = vmatprep.subr.mxu0 0.0
    %377 = vmatpush1.msra.mxu0 %v149
    %378 = vmatprep.subr.mxu0 0.0
    %379 = vmatpush2.msra.mxu0 0.0
    %380 = vmatprep.subr.mxu0 0.0
    %381 = vmatpush2.msra.mxu0 0.0
    %382 = vmatprep.subr.mxu0 0.0
    %383 = vmatpush2.msra.mxu0 0.0
    %384 = vmatprep.subr.mxu0 0.0
    %385 = vmatpush2.msra.mxu0 0.0
    %386 = vmatprep.subr.mxu0 0.0
    %387 = vmatpush2.msra.mxu0 0.0
    %388 = vmatprep.subr.mxu0 0.0
    %389 = vmatpush2.msra.mxu0 0.0
    %390 = vmatprep.subr.mxu0 0.0
    %391 = vmatpush2.msra.mxu0 0.0
    %392 = vmatprep.subr.mxu0 0.0
    %393 = vmatpush2.msra.mxu0 0.0
    %394 = vmatprep.subr.mxu0 0.0
    %395 = vmatpush2.msra.mxu0 0.0
    %396 = vmatprep.subr.mxu0 0.0
    %397 = vmatpush2.msra.mxu0 0.0
    %398 = vmatprep.subr.mxu0 0.0
    %399 = vmatpush2.msra.mxu0 0.0
    %400 = vmatprep.subr.mxu0 0.0
    %401 = vmatpush2.msra.mxu0 0.0
    %402 = vmatprep.subr.mxu0 0.0
    %403 = vmatpush2.msra.mxu0 0.0
    %404 = vmatprep.subr.mxu0 0.0
    %405 = vmatpush2.msra.mxu0 0.0
    %406 = vmatprep.subr.mxu0 0.0
    %407 = vmatpush2.msra.mxu0 0.0
    %408 = vmatprep.subr.mxu0 0.0
    %409 = vmatpush2.msra.mxu0 0.0
    %410 = vmatprep.mubr.f32.mxu0 0.0
    %411 = vmatmul.mubr.f32.gmra.mxu0 %v251
    %v412 = vpop.f32.mrf.mxu0
    %v413 = vadd.f32 %v328, %v412
    %v414 = vpop.f32.mrf.mxu0
    %415 = vmatprep.mubr.f32.mxu0 0.0
    %416 = vmatmul.mubr.f32.gmra.mxu0 %v252
    %v417 = vpop.f32.mrf.mxu0
    %v418 = vadd.f32 %v333, %v417
    %v419 = vpop.f32.mrf.mxu0
    %420 = vmatprep.mubr.f32.mxu0 0.0
    %421 = vmatmul.mubr.f32.gmra.mxu0 %v253
    %v422 = vpop.f32.mrf.mxu0
    %v423 = vadd.f32 %v338, %v422
    %v424 = vpop.f32.mrf.mxu0
    %425 = vmatprep.mubr.f32.mxu0 0.0
    %426 = vmatmul.mubr.f32.gmra.mxu0 %v254
    %v427 = vpop.f32.mrf.mxu0
    %v428 = vadd.f32 %v343, %v427
    %v429 = vpop.f32.mrf.mxu0
    %430 = vdwg.mxu0
    %v431 = vadd.f32 %v413, %v418
    %v432 = vadd.f32 %v431, %v423
    %v433 = vadd.f32 %v432, %v428
    %v434 = vrot.slane %v433, 4
    %v435 = vadd.f32 %v433, %v434
    %v436 = vrot.slane %v435, 2
    %v437 = vadd.f32 %v435, %v436
    %v438 = vrot.slane %v437, 1
    %v439 = vadd.f32 %v437, %v438
    %v440 = vrcp.pop 32.0
    %v441 = vmul.f32 %v439, %v440
    %v442 = vsub.f32 %v413, %v441
    %v443 = vsub.f32 %v418, %v441
    %v444 = vsub.f32 %v423, %v441
    %v445 = vsub.f32 %v428, %v441
    %v446 = vmul.f32 %v442, %v442
    %v447 = vmul.f32 %v443, %v443
    %v448 = vmul.f32 %v444, %v444
    %v449 = vmul.f32 %v445, %v445
    %v450 = vadd.f32 %v446, %v447
    %v451 = vadd.f32 %v450, %v448
    %v452 = vadd.f32 %v451, %v449
    %v453 = vrot.slane %v452, 4
    %v454 = vadd.f32 %v452, %v453
    %v455 = vrot.slane %v454, 2
    %v456 = vadd.f32 %v454, %v455
    %v457 = vrot.slane %v456, 1
    %v458 = vadd.f32 %v456, %v457
    %v459 = vmul.f32 %v458, %v440
    %v460 = vadd.f32 %v459, 1e-05
    %v461 = vrsqrt.pop %v460
    %v462 = vmul.f32 %v461, %v166
    %v463 = vmul.f32 %v441, %v462
    %v464 = vsub.f32 %v167, %v463
    %v465 = vlaneseq
    %v466 = vshrl.u32 %v465, 7
    %v467 = vsub.s32 0, %v466
    %v468 = vrot.slane %v462, %v467
    %v469 = vmul.f32 %v413, %v468
    %v470 = vmul.f32 %v418, %v468
    %v471 = vmul.f32 %v423, %v468
    %v472 = vmul.f32 %v428, %v468
    %v474 = vlaneseq
    %v475 = vshrl.u32 %v474, 7
    %v476 = vsub.s32 0, %v475
    %v477 = vrot.slane %v464, %v476
    %v479 = vadd.f32 %v469, %v477
    %v480 = vadd.f32 %v470, %v477
    %v481 = vadd.f32 %v471, %v477
    %v482 = vadd.f32 %v472, %v477
    %v483 = vmax.f32 %v479, 0.0
    %v484 = vmax.f32 %v480, 0.0
    %v485 = vmax.f32 %v481, 0.0
    %v486 = vmax.f32 %v482, 0.0
    %487 = vst [vmem:[#allocation2] sm:$0xff] %v483
    %488 = vst [vmem:[#allocation2 + $0x8] sm:$0xff] %v484
    %489 = vst [vmem:[#allocation2 + $0x10] sm:$0xff] %v485
    %490 = vst [vmem:[#allocation2 + $0x18] sm:$0xff] %v486
    %v491 = vld [vmem:[#allocation2] ss:$2 sm:$0xff]
    %s492 = scalar_lea.vmem [#allocation2], 16
    %v493 = vld [vmem:[%s492] ss:$2 sm:$0xff]
    %s494 = scalar_lea.vmem [#allocation2], 1
    %v495 = vld [vmem:[%s494] ss:$2 sm:$0xff]
    %s496 = scalar_lea.vmem [#allocation2], 17
    %v497 = vld [vmem:[%s496] ss:$2 sm:$0xff]
    %v498 = vmax.f32 %v491, %v495
    %v499 = vmax.f32 %v493, %v497
    %v500 = vld [vmem:[#allocation9] sm:$0xff]
    %v501 = vld [vmem:[#allocation9 + $0x8] sm:$0xff]
    %v502 = vld [vmem:[#allocation9 + $0x10] sm:$0xff]
    %v503 = vld [vmem:[#allocation9 + $0x18] sm:$0xff]
    %v504 = vld [vmem:[#allocation9 + $0x20] sm:$0xff]
    %v505 = vld [vmem:[#allocation9 + $0x28] sm:$0xff]
    %v506 = vld [vmem:[#allocation9 + $0x30] sm:$0xff]
    %v507 = vld [vmem:[#allocation9 + $0x38] sm:$0xff]
    %v508 = vld [vmem:[#allocation9 + $0x40] sm:$0xff]
    %v509 = vld [vmem:[#allocation9 + $0x48] sm:$0xff]
    %v510 = vld [vmem:[#allocation9 + $0x50] sm:$0xff]
    %v511 = vld [vmem:[#allocation9 + $0x58] sm:$0xff]
    %v512 = vld [vmem:[#allocation9 + $0x60] sm:$0xff]
    %v513 = vld [vmem:[#allocation9 + $0x68] sm:$0xff]
    %v514 = vld [vmem:[#allocation9 + $0x70] sm:$0xff]
    %v515 = vld [vmem:[#allocation9 + $0x78] sm:$0xff]
    %v516 = vld [vmem:[#allocation9 + $0x80] sm:$0xff]
    %v517 = vld [vmem:[#allocation9 + $0x88] sm:$0xff]
    %v518 = vld [vmem:[#allocation9 + $0x90] sm:$0xff]
    %v519 = vld [vmem:[#allocation9 + $0x98] sm:$0xff]
    %v520 = vld [vmem:[#allocation9 + $0xa0] sm:$0xff]
    %v521 = vld [vmem:[#allocation9 + $0xa8] sm:$0xff]
    %v522 = vld [vmem:[#allocation9 + $0xb0] sm:$0xff]
    %v523 = vld [vmem:[#allocation9 + $0xb8] sm:$0xff]
    %v524 = vld [vmem:[#allocation9 + $0xc0] sm:$0xff]
    %v525 = vld [vmem:[#allocation9 + $0xc8] sm:$0xff]
    %v526 = vld [vmem:[#allocation9 + $0xd0] sm:$0xff]
    %v527 = vld [vmem:[#allocation9 + $0xd8] sm:$0xff]
    %v528 = vld [vmem:[#allocation9 + $0xe0] sm:$0xff]
    %v529 = vld [vmem:[#allocation9 + $0xe8] sm:$0xff]
    %v530 = vld [vmem:[#allocation9 + $0xf0] sm:$0xff]
    %v531 = vld [vmem:[#allocation9 + $0xf8] sm:$0xff]
    %v532 = vld [vmem:[#allocation9 + $0x100] sm:$0xff]
    %v533 = vld [vmem:[#allocation9 + $0x108] sm:$0xff]
    %v534 = vld [vmem:[#allocation9 + $0x110] sm:$0xff]
    %v535 = vld [vmem:[#allocation9 + $0x118] sm:$0xff]
    %v536 = vld [vmem:[#allocation9 + $0x120] sm:$0xff]
    %v537 = vld [vmem:[#allocation9 + $0x128] sm:$0xff]
    %v538 = vld [vmem:[#allocation9 + $0x130] sm:$0xff]
    %v539 = vld [vmem:[#allocation9 + $0x138] sm:$0xff]
    %v540 = vld [vmem:[#allocation9 + $0x140] sm:$0xff]
    %v541 = vld [vmem:[#allocation9 + $0x148] sm:$0xff]
    %v542 = vld [vmem:[#allocation9 + $0x150] sm:$0xff]
    %v543 = vld [vmem:[#allocation9 + $0x158] sm:$0xff]
    %v544 = vld [vmem:[#allocation9 + $0x160] sm:$0xff]
    %v545 = vld [vmem:[#allocation9 + $0x168] sm:$0xff]
    %v546 = vld [vmem:[#allocation9 + $0x170] sm:$0xff]
    %v547 = vld [vmem:[#allocation9 + $0x178] sm:$0xff]
    %v548 = vld [vmem:[%s6] sm:$0x1]
    %v549 = vld [vmem:[%s7] sm:$0x1]
    %v550 = vld [vmem:[%s8] sm:$0x1]
    %vm551 = vcmp.lt.s32.totalorder %v169, 0
    %v552 = vsub.s32 0, %v169
    %v553 = vsel %vm551, %v552, %v169
    %v554 = vshrl.u32 %v553, 3
    %v555 = vand.u32 %v553, 7
    %v556 = vsub.s32 0, %v555
    %v557 = vsel %vm551, %v556, %v555
    %vm558 = vcmp.lt.s32.totalorder %v170, 0
    %v559 = vsub.s32 0, %v170
    %v560 = vsel %vm558, %v559, %v170
    %v561 = vshrl.u32 %v560, 3
    %v562 = vand.u32 %v560, 7
    %v563 = vsub.s32 0, %v562
    %v564 = vsel %vm558, %v563, %v562
    %vm565 = vcmp.ne.s32.totalorder %v557, 0
    %vm566 = vcmp.ne.s32.totalorder %v564, 0
    %vm567 = vcmp.lt.s32.totalorder %v557, 0
    %vm568 = vcmp.lt.s32.totalorder %v564, 0
    %vm569 = vmand %vm567, %vm565
    %vm570 = vmand %vm568, %vm566
    %v571 = vadd.s32 %v557, 8
    %v572 = vadd.s32 %v564, 8
    %v573 = vsel %vm569, %v571, %v557
    %v574 = vsel %vm570, %v572, %v564
    %vm575 = vcmp.eq.s32.totalorder %v573, 0
    %vm576 = vcmp.eq.s32.totalorder %v574, 0
    %v577 = vrot.slane %v498, 7
    %v578 = vrot.slane %v499, 7
    %v579 = vsel %vm229, %v577, %v578
    %v580 = vsel %vm229, %v578, %v577
    %v581 = vsel %vm575, 0.0, %v580
    %v582 = vsel %vm576, 0.0, %v579
    %vm583 = vcmp.eq.s32.totalorder %v573, 7
    %vm584 = vcmp.eq.s32.totalorder %v574, 7
    %v585 = vrot.slane %v498, 1
    %v586 = vrot.slane %v499, 1
    %v587 = vsel %vm246, %v585, %v586
    %v588 = vsel %vm246, %v586, %v585
    %v589 = vsel %vm583, 0.0, %v587
    %v590 = vsel %vm584, 0.0, %v588
    %v592 = vlaneseq
    %v593 = vshrl.u32 %v592, 7
    %v594 = vsub.s32 0, %v593
    %v595 = vrot.slane %v548, %v594
    %597 = vmatprep.subr.mxu0 0.0
    %598 = vmatpush1.msra.mxu0 %v515
    %599 = vmatprep.subr.mxu0 0.0
    %600 = vmatpush1.msra.mxu0 %v514
    %601 = vmatprep.subr.mxu0 0.0
    %602 = vmatpush1.msra.mxu0 %v513
    %603 = vmatprep.subr.mxu0 0.0
    %604 = vmatpush1.msra.mxu0 %v512
    %605 = vmatprep.subr.mxu0 0.0
    %606 = vmatpush1.msra.mxu0 %v511
    %607 = vmatprep.subr.mxu0 0.0
    %608 = vmatpush1.msra.mxu0 %v510
    %609 = vmatprep.subr.mxu0 0.0
    %610 = vmatpush1.msra.mxu0 %v509
    %611 = vmatprep.subr.mxu0 0.0
    %612 = vmatpush1.msra.mxu0 %v508
    %613 = vmatprep.subr.mxu0 0.0
    %614 = vmatpush1.msra.mxu0 %v507
    %615 = vmatprep.subr.mxu0 0.0
    %616 = vmatpush1.msra.mxu0 %v506
    %617 = vmatprep.subr.mxu0 0.0
    %618 = vmatpush1.msra.mxu0 %v505
    %619 = vmatprep.subr.mxu0 0.0
    %620 = vmatpush1.msra.mxu0 %v504
    %621 = vmatprep.subr.mxu0 0.0
    %622 = vmatpush1.msra.mxu0 %v503
    %623 = vmatprep.subr.mxu0 0.0
    %624 = vmatpush1.msra.mxu0 %v502
    %625 = vmatprep.subr.mxu0 0.0
    %626 = vmatpush1.msra.mxu0 %v501
    %627 = vmatprep.subr.mxu0 0.0
    %628 = vmatpush1.msra.mxu0 %v500
    %629 = vmatprep.subr.mxu0 0.0
    %630 = vmatpush2.msra.mxu0 %v531
    %631 = vmatprep.subr.mxu0 0.0
    %632 = vmatpush2.msra.mxu0 %v530
    %633 = vmatprep.subr.mxu0 0.0
    %634 = vmatpush2.msra.mxu0 %v529
    %635 = vmatprep.subr.mxu0 0.0
    %636 = vmatpush2.msra.mxu0 %v528
    %637 = vmatprep.subr.mxu0 0.0
    %638 = vmatpush2.msra.mxu0 %v527
    %639 = vmatprep.subr.mxu0 0.0
    %640 = vmatpush2.msra.mxu0 %v526
    %641 = vmatprep.subr.mxu0 0.0
    %642 = vmatpush2.msra.mxu0 %v525
    %643 = vmatprep.subr.mxu0 0.0
    %644 = vmatpush2.msra.mxu0 %v524
    %645 = vmatprep.subr.mxu0 0.0
    %646 = vmatpush2.msra.mxu0 %v523
    %647 = vmatprep.subr.mxu0 0.0
    %648 = vmatpush2.msra.mxu0 %v522
    %649 = vmatprep.subr.mxu0 0.0
    %650 = vmatpush2.msra.mxu0 %v521
    %651 = vmatprep.subr.mxu0 0.0
    %652 = vmatpush2.msra.mxu0 %v520
    %653 = vmatprep.subr.mxu0 0.0
    %654 = vmatpush2.msra.mxu0 %v519
    %655 = vmatprep.subr.mxu0 0.0
    %656 = vmatpush2.msra.mxu0 %v518
    %657 = vmatprep.subr.mxu0 0.0
    %658 = vmatpush2.msra.mxu0 %v517
    %659 = vmatprep.subr.mxu0 0.0
    %660 = vmatpush2.msra.mxu0 %v516
    %661 = vmatprep.mubr.f32.mxu0 %v498
    %662 = vmatmul.mubr.f32.gmra.mxu0 %v581
    %v663 = vpop.f32.mrf.mxu0
    %v664 = vadd.f32 %v595, %v663
    %v665 = vpop.f32.mrf.mxu0
    %666 = vmatprep.mubr.f32.mxu0 %v499
    %667 = vmatmul.mubr.f32.gmra.mxu0 %v582
    %v668 = vpop.f32.mrf.mxu0
    %v669 = vadd.f32 %v595, %v668
    %v670 = vpop.f32.mrf.mxu0
    %671 = vdwg.mxu0
    %672 = vmatprep.subr.mxu0 0.0
    %673 = vmatpush1.msra.mxu0 %v547
    %674 = vmatprep.subr.mxu0 0.0
    %675 = vmatpush1.msra.mxu0 %v546
    %676 = vmatprep.subr.mxu0 0.0
    %677 = vmatpush1.msra.mxu0 %v545
    %678 = vmatprep.subr.mxu0 0.0
    %679 = vmatpush1.msra.mxu0 %v544
    %680 = vmatprep.subr.mxu0 0.0
    %681 = vmatpush1.msra.mxu0 %v543
    %682 = vmatprep.subr.mxu0 0.0
    %683 = vmatpush1.msra.mxu0 %v542
    %684 = vmatprep.subr.mxu0 0.0
    %685 = vmatpush1.msra.mxu0 %v541
    %686 = vmatprep.subr.mxu0 0.0
    %687 = vmatpush1.msra.mxu0 %v540
    %688 = vmatprep.subr.mxu0 0.0
    %689 = vmatpush1.msra.mxu0 %v539
    %690 = vmatprep.subr.mxu0 0.0
    %691 = vmatpush1.msra.mxu0 %v538
    %692 = vmatprep.subr.mxu0 0.0
    %693 = vmatpush1.msra.mxu0 %v537
    %694 = vmatprep.subr.mxu0 0.0
    %695 = vmatpush1.msra.mxu0 %v536
    %696 = vmatprep.subr.mxu0 0.0
    %697 = vmatpush1.msra.mxu0 %v535
    %698 = vmatprep.subr.mxu0 0.0
    %699 = vmatpush1.msra.mxu0 %v534
    %700 = vmatprep.subr.mxu0 0.0
    %701 = vmatpush1.msra.mxu0 %v533
    %702 = vmatprep.subr.mxu0 0.0
    %703 = vmatpush1.msra.mxu0 %v532
    %704 = vmatprep.subr.mxu0 0.0
    %705 = vmatpush2.msra.mxu0 0.0
    %706 = vmatprep.subr.mxu0 0.0
    %707 = vmatpush2.msra.mxu0 0.0
    %708 = vmatprep.subr.mxu0 0.0
    %709 = vmatpush2.msra.mxu0 0.0
    %710 = vmatprep.subr.mxu0 0.0
    %711 = vmatpush2.msra.mxu0 0.0
    %712 = vmatprep.subr.mxu0 0.0
    %713 = vmatpush2.msra.mxu0 0.0
    %714 = vmatprep.subr.mxu0 0.0
    %715 = vmatpush2.msra.mxu0 0.0
    %716 = vmatprep.subr.mxu0 0.0
    %717 = vmatpush2.msra.mxu0 0.0
    %718 = vmatprep.subr.mxu0 0.0
    %719 = vmatpush2.msra.mxu0 0.0
    %720 = vmatprep.subr.mxu0 0.0
    %721 = vmatpush2.msra.mxu0 0.0
    %722 = vmatprep.subr.mxu0 0.0
    %723 = vmatpush2.msra.mxu0 0.0
    %724 = vmatprep.subr.mxu0 0.0
    %725 = vmatpush2.msra.mxu0 0.0
    %726 = vmatprep.subr.mxu0 0.0
    %727 = vmatpush2.msra.mxu0 0.0
    %728 = vmatprep.subr.mxu0 0.0
    %729 = vmatpush2.msra.mxu0 0.0
    %730 = vmatprep.subr.mxu0 0.0
    %731 = vmatpush2.msra.mxu0 0.0
    %732 = vmatprep.subr.mxu0 0.0
    %733 = vmatpush2.msra.mxu0 0.0
    %734 = vmatprep.subr.mxu0 0.0
    %735 = vmatpush2.msra.mxu0 0.0
    %736 = vmatprep.mubr.f32.mxu0 0.0
    %737 = vmatmul.mubr.f32.gmra.mxu0 %v589
    %v738 = vpop.f32.mrf.mxu0
    %v739 = vadd.f32 %v664, %v738
    %v740 = vpop.f32.mrf.mxu0
    %741 = vmatprep.mubr.f32.mxu0 0.0
    %742 = vmatmul.mubr.f32.gmra.mxu0 %v590
    %v743 = vpop.f32.mrf.mxu0
    %v744 = vadd.f32 %v669, %v743
    %v745 = vpop.f32.mrf.mxu0
    %746 = vdwg.mxu0
    %v747 = vadd.f32 %v739, %v744
    %v748 = vrot.slane %v747, 4
    %v749 = vadd.f32 %v747, %v748
    %v750 = vrot.slane %v749, 2
    %v751 = vadd.f32 %v749, %v750
    %v752 = vrot.slane %v751, 1
    %v753 = vadd.f32 %v751, %v752
    %v754 = vrcp.pop 16.0
    %v755 = vmul.f32 %v753, %v754
    %v756 = vsub.f32 %v739, %v755
    %v757 = vsub.f32 %v744, %v755
    %v758 = vmul.f32 %v756, %v756
    %v759 = vmul.f32 %v757, %v757
    %v760 = vadd.f32 %v758, %v759
    %v761 = vrot.slane %v760, 4
    %v762 = vadd.f32 %v760, %v761
    %v763 = vrot.slane %v762, 2
    %v764 = vadd.f32 %v762, %v763
    %v765 = vrot.slane %v764, 1
    %v766 = vadd.f32 %v764, %v765
    %v767 = vmul.f32 %v766, %v754
    %v768 = vadd.f32 %v767, 1e-05
    %v769 = vrsqrt.pop %v768
    %v770 = vmul.f32 %v769, %v549
    %v771 = vmul.f32 %v755, %v770
    %v772 = vsub.f32 %v550, %v771
    %v773 = vlaneseq
    %v774 = vshrl.u32 %v773, 7
    %v775 = vsub.s32 0, %v774
    %v776 = vrot.slane %v770, %v775
    %v777 = vmul.f32 %v739, %v776
    %v778 = vmul.f32 %v744, %v776
    %v780 = vlaneseq
    %v781 = vshrl.u32 %v780, 7
    %v782 = vsub.s32 0, %v781
    %v783 = vrot.slane %v772, %v782
    %v785 = vadd.f32 %v777, %v783
    %v786 = vadd.f32 %v778, %v783
    %v787 = vmax.f32 %v785, 0.0
    %v788 = vmax.f32 %v786, 0.0
    %789 = vst [vmem:[#allocation3] sm:$0xff] %v787
    %790 = vst [vmem:[#allocation3 + $0x8] sm:$0xff] %v788
    %v791 = vld [vmem:[#allocation3] ss:$2 sm:$0xff]
    %s792 = scalar_lea.vmem [#allocation3], 1
    %v793 = vld [vmem:[%s792] ss:$2 sm:$0xff]
    %v794 = vmax.f32 %v791, %v793
    %v796 = vcombine.high %v794, %v794
    %vm798 = vcmask 1043456
    %v799 = vsel %vm798, %v794, 0.0
    %v800 = vrot.slane %v799, 4
    %v801 = vadd.f32 %v799, %v800
    %v802 = vrot.slane %v801, 2
    %v803 = vadd.f32 %v801, %v802
    %v804 = vrot.slane %v803, 1
    %v805 = vadd.f32 %v803, %v804
    %v806 = vsel %vm798, %v796, 0.0
    %v807 = vrot.slane %v806, 4
    %v808 = vadd.f32 %v806, %v807
    %v809 = vrot.slane %v808, 2
    %v810 = vadd.f32 %v808, %v809
    %v811 = vrot.slane %v810, 1
    %v812 = vadd.f32 %v810, %v811
    %v813 = vld [vmem:[#allocation10] sm:$0xff]
    %v814 = vld [vmem:[#allocation10 + $0x8] sm:$0xff]
    %v815 = vld [vmem:[#allocation10 + $0x10] sm:$0xff]
    %v816 = vld [vmem:[#allocation10 + $0x18] sm:$0xff]
    %v817 = vld [vmem:[#allocation10 + $0x20] sm:$0xff]
    %v818 = vld [vmem:[#allocation10 + $0x28] sm:$0xff]
    %v819 = vld [vmem:[#allocation10 + $0x30] sm:$0xff]
    %v820 = vld [vmem:[#allocation10 + $0x38] sm:$0xff]
    %v821 = vld [vmem:[#allocation10 + $0x40] sm:$0xff]
    %v822 = vld [vmem:[#allocation10 + $0x48] sm:$0xff]
    %v823 = vld [vmem:[#allocation10 + $0x50] sm:$0xff]
    %v824 = vld [vmem:[#allocation10 + $0x58] sm:$0xff]
    %v825 = vld [vmem:[#allocation10 + $0x60] sm:$0xff]
    %v826 = vld [vmem:[#allocation10 + $0x68] sm:$0xff]
    %v827 = vld [vmem:[#allocation10 + $0x70] sm:$0xff]
    %v828 = vld [vmem:[#allocation10 + $0x78] sm:$0xff]
    %v829 = vld [vmem:[%s10] sm:$0x1]
    %v831 = vlaneseq
    %v832 = vshrl.u32 %v831, 7
    %v833 = vsub.s32 0, %v832
    %v834 = vrot.slane %v829, %v833
    %vm838 = vcmask 1041409
    %v839 = vsel %vm838, %v812, %v805
    %841 = vmatprep.subr.mxu0 0.0
    %842 = vmatpush1.msra.mxu0 %v828
    %843 = vmatprep.subr.mxu0 0.0
    %844 = vmatpush1.msra.mxu0 %v827
    %845 = vmatprep.subr.mxu0 0.0
    %846 = vmatpush1.msra.mxu0 %v826
    %847 = vmatprep.subr.mxu0 0.0
    %848 = vmatpush1.msra.mxu0 %v825
    %849 = vmatprep.subr.mxu0 0.0
    %850 = vmatpush1.msra.mxu0 %v824
    %851 = vmatprep.subr.mxu0 0.0
    %852 = vmatpush1.msra.mxu0 %v823
    %853 = vmatprep.subr.mxu0 0.0
    %854 = vmatpush1.msra.mxu0 %v822
    %855 = vmatprep.subr.mxu0 0.0
    %856 = vmatpush1.msra.mxu0 %v821
    %857 = vmatprep.subr.mxu0 0.0
    %858 = vmatpush1.msra.mxu0 %v820
    %859 = vmatprep.subr.mxu0 0.0
    %860 = vmatpush1.msra.mxu0 %v819
    %861 = vmatprep.subr.mxu0 0.0
    %862 = vmatpush1.msra.mxu0 %v818
    %863 = vmatprep.subr.mxu0 0.0
    %864 = vmatpush1.msra.mxu0 %v817
    %865 = vmatprep.subr.mxu0 0.0
    %866 = vmatpush1.msra.mxu0 %v816
    %867 = vmatprep.subr.mxu0 0.0
    %868 = vmatpush1.msra.mxu0 %v815
    %869 = vmatprep.subr.mxu0 0.0
    %870 = vmatpush1.msra.mxu0 %v814
    %871 = vmatprep.subr.mxu0 0.0
    %872 = vmatpush1.msra.mxu0 %v813
    %873 = vmatprep.subr.mxu0 0.0
    %874 = vmatpush2.msra.mxu0 0.0
    %875 = vmatprep.subr.mxu0 0.0
    %876 = vmatpush2.msra.mxu0 0.0
    %877 = vmatprep.subr.mxu0 0.0
    %878 = vmatpush2.msra.mxu0 0.0
    %879 = vmatprep.subr.mxu0 0.0
    %880 = vmatpush2.msra.mxu0 0.0
    %881 = vmatprep.subr.mxu0 0.0
    %882 = vmatpush2.msra.mxu0 0.0
    %883 = vmatprep.subr.mxu0 0.0
    %884 = vmatpush2.msra.mxu0 0.0
    %885 = vmatprep.subr.mxu0 0.0
    %886 = vmatpush2.msra.mxu0 0.0
    %887 = vmatprep.subr.mxu0 0.0
    %888 = vmatpush2.msra.mxu0 0.0
    %889 = vmatprep.subr.mxu0 0.0
    %890 = vmatpush2.msra.mxu0 0.0
    %891 = vmatprep.subr.mxu0 0.0
    %892 = vmatpush2.msra.mxu0 0.0
    %893 = vmatprep.subr.mxu0 0.0
    %894 = vmatpush2.msra.mxu0 0.0
    %895 = vmatprep.subr.mxu0 0.0
    %896 = vmatpush2.msra.mxu0 0.0
    %897 = vmatprep.subr.mxu0 0.0
    %898 = vmatpush2.msra.mxu0 0.0
    %899 = vmatprep.subr.mxu0 0.0
    %900 = vmatpush2.msra.mxu0 0.0
    %901 = vmatprep.subr.mxu0 0.0
    %902 = vmatpush2.msra.mxu0 0.0
    %903 = vmatprep.subr.mxu0 0.0
    %904 = vmatpush2.msra.mxu0 0.0
    %905 = vmatprep.mubr.f32.mxu0 0.0
    %906 = vmatmul.mubr.f32.gmra.mxu0 %v839
    %v907 = vpop.f32.mrf.mxu0
    %v908 = vadd.f32 %v834, %v907
    %v909 = vpop.f32.mrf.mxu0
    %910 = vdwg.mxu0
    %v911 = vmax.f32 %v908, 0.0
    %v912 = vld [vmem:[#allocation12] sm:$0xff]
    %v913 = vld [vmem:[#allocation12 + $0x8] sm:$0xff]
    %v914 = vld [vmem:[#allocation12 + $0x10] sm:$0xff]
    %v915 = vld [vmem:[#allocation12 + $0x18] sm:$0xff]
    %v916 = vld [vmem:[#allocation12 + $0x20] sm:$0xff]
    %v917 = vld [vmem:[#allocation12 + $0x28] sm:$0xff]
    %v918 = vld [vmem:[#allocation12 + $0x30] sm:$0xff]
    %v919 = vld [vmem:[#allocation12 + $0x38] sm:$0xff]
    %v920 = vld [vmem:[#allocation12 + $0x40] sm:$0xff]
    %v921 = vld [vmem:[#allocation12 + $0x48] sm:$0xff]
    %v922 = vld [vmem:[#allocation12 + $0x50] sm:$0xff]
    %v923 = vld [vmem:[#allocation12 + $0x58] sm:$0xff]
    %v924 = vld [vmem:[#allocation12 + $0x60] sm:$0xff]
    %v925 = vld [vmem:[#allocation12 + $0x68] sm:$0xff]
    %v926 = vld [vmem:[#allocation12 + $0x70] sm:$0xff]
    %v927 = vld [vmem:[#allocation12 + $0x78] sm:$0xff]
    %v928 = vld [vmem:[%s12] sm:$0x1]
    %v930 = vlaneseq
    %v931 = vshrl.u32 %v930, 7
    %v932 = vsub.s32 0, %v931
    %v933 = vrot.slane %v928, %v932
    %935 = vmatprep.subr.mxu0 0.0
    %936 = vmatpush1.msra.mxu0 %v927
    %937 = vmatprep.subr.mxu0 0.0
    %938 = vmatpush1.msra.mxu0 %v926
    %939 = vmatprep.subr.mxu0 0.0
    %940 = vmatpush1.msra.mxu0 %v925
    %941 = vmatprep.subr.mxu0 0.0
    %942 = vmatpush1.msra.mxu0 %v924
    %943 = vmatprep.subr.mxu0 0.0
    %944 = vmatpush1.msra.mxu0 %v923
    %945 = vmatprep.subr.mxu0 0.0
    %946 = vmatpush1.msra.mxu0 %v922
    %947 = vmatprep.subr.mxu0 0.0
    %948 = vmatpush1.msra.mxu0 %v921
    %949 = vmatprep.subr.mxu0 0.0
    %950 = vmatpush1.msra.mxu0 %v920
    %951 = vmatprep.subr.mxu0 0.0
    %952 = vmatpush1.msra.mxu0 %v919
    %953 = vmatprep.subr.mxu0 0.0
    %954 = vmatpush1.msra.mxu0 %v918
    %955 = vmatprep.subr.mxu0 0.0
    %956 = vmatpush1.msra.mxu0 %v917
    %957 = vmatprep.subr.mxu0 0.0
    %958 = vmatpush1.msra.mxu0 %v916
    %959 = vmatprep.subr.mxu0 0.0
    %960 = vmatpush1.msra.mxu0 %v915
    %961 = vmatprep.subr.mxu0 0.0
    %962 = vmatpush1.msra.mxu0 %v914
    %963 = vmatprep.subr.mxu0 0.0
    %964 = vmatpush1.msra.mxu0 %v913
    %965 = vmatprep.subr.mxu0 0.0
    %966 = vmatpush1.msra.mxu0 %v912
    %967 = vmatprep.subr.mxu0 0.0
    %968 = vmatpush2.msra.mxu0 0.0
    %969 = vmatprep.subr.mxu0 0.0
    %970 = vmatpush2.msra.mxu0 0.0
    %971 = vmatprep.subr.mxu0 0.0
    %972 = vmatpush2.msra.mxu0 0.0
    %973 = vmatprep.subr.mxu0 0.0
    %974 = vmatpush2.msra.mxu0 0.0
    %975 = vmatprep.subr.mxu0 0.0
    %976 = vmatpush2.msra.mxu0 0.0
    %977 = vmatprep.subr.mxu0 0.0
    %978 = vmatpush2.msra.mxu0 0.0
    %979 = vmatprep.subr.mxu0 0.0
    %980 = vmatpush2.msra.mxu0 0.0
    %981 = vmatprep.subr.mxu0 0.0
    %982 = vmatpush2.msra.mxu0 0.0
    %983 = vmatprep.subr.mxu0 0.0
    %984 = vmatpush2.msra.mxu0 0.0
    %985 = vmatprep.subr.mxu0 0.0
    %986 = vmatpush2.msra.mxu0 0.0
    %987 = vmatprep.subr.mxu0 0.0
    %988 = vmatpush2.msra.mxu0 0.0
    %989 = vmatprep.subr.mxu0 0.0
    %990 = vmatpush2.msra.mxu0 0.0
    %991 = vmatprep.subr.mxu0 0.0
    %992 = vmatpush2.msra.mxu0 0.0
    %993 = vmatprep.subr.mxu0 0.0
    %994 = vmatpush2.msra.mxu0 0.0
    %995 = vmatprep.subr.mxu0 0.0
    %996 = vmatpush2.msra.mxu0 0.0
    %997 = vmatprep.subr.mxu0 0.0
    %998 = vmatpush2.msra.mxu0 0.0
    %999 = vmatprep.mubr.f32.mxu0 0.0
    %1000 = vmatmul.mubr.f32.gmra.mxu0 %v911
    %v1001 = vpop.f32.mrf.mxu0
    %v1002 = vadd.f32 %v933, %v1001
    %v1003 = vpop.f32.mrf.mxu0
    %1004 = vdwg.mxu0
    %v1005 = vxor.u32 %v1002, 2147483648
    %v1006 = vmul.f32 %v1005, 1.442695
    %v1007 = vpow.pop %v1006
    %v1008 = vadd.f32 %v1007, 1.0
    %v1009 = vrcp.pop %v1008
    %v1010 = vmul.f32 1.0, %v1009
    %1011 = vst [vmem:[#allocation13] sm:$0x3] %v1010
    // Predicated region
    $region74: #{tpu_custom_call.1} parent=1 // pred_check
      _
    $region75: #{tpu_custom_call.1} parent=1 // pred_check_branch
      %1013 = sbr.rel (0) target = $region77
    $region76: #{tpu_custom_call.1} parent=1 // pred_region
      %s1015 = ssub.s32 32, 32
      %1016 = vsyncadd [#allocation6], %s1015
      %s1018 = sshll.u32 [#allocation13], 4
      %s1019 = int_to_ptr.vmem [resolvable:$true] %s1018
      %1021 = dma.vmem_to_hbm [thread:$0]  %s1019, 32, %s13, [#allocation6]
    $region77: #{tpu_custom_call.1} parent=1 // pred_fallthru
      _
    // Predicated region
    $region78: #{tpu_custom_call.1} parent=1 // pred_check
      _
    $region79: #{tpu_custom_call.1} parent=1 // pred_check_branch
      %1023 = sbr.rel (0) target = $region81
    $region80: #{tpu_custom_call.1} parent=1 // pred_region
      %1024 = dma.done [#allocation6], 32
    $region81: #{tpu_custom_call.1} parent=1 // pred_fallthru
      _
    %1025 = vsyncpa [#allocation5], 1
    %1026 = vsyncpa [#allocation8], 1
    %1027 = vsyncpa [#allocation11], 1
    %1028 = vsyncpa [#allocation6], 1

</llo_original>
